<compile_context>
chip_gen: v7x
topology: tpu7x:2x2x1
jax: 0.10.0
libtpu: 0.0.40
codegen_flags: <defaults>
</compile_context>

<pallas_src>
import functools

import jax
import jax.numpy as jnp
from jax.experimental import pallas as pl
from jax.experimental.pallas import tpu as pltpu


def _round_up(x, m):
    return ((x + m - 1) // m) * m


def _dueling_kernel(x_ref,
                    w1_ref, b1_ref,
                    w24_ref, b24_ref,
                    wout_ref, bout_ref,
                    out_ref,
                    *, n_actions):
    x = x_ref[...]

    # feature = ReLU(state @ W1 + b1)                               [TILE_B, Hp]
    feat = jnp.dot(x, w1_ref[...], preferred_element_type=jnp.float32) + b1_ref[...]
    feat = jnp.maximum(feat, 0.0)

    # Fused head hidden layers: ReLU(feat @ [W2 | W4] + [b2 | b4])  [TILE_B, 2*Hp]
    hv = jnp.dot(feat.astype(w24_ref.dtype), w24_ref[...],
                 preferred_element_type=jnp.float32) + b24_ref[...]
    hv = jnp.maximum(hv, 0.0)

    # Fused head outputs via block-diagonal weight:                 [TILE_B, Np]
    #   lanes [0, A)  -> advantage,  lane A -> value,  lanes > A -> 0
    heads = jnp.dot(hv.astype(wout_ref.dtype), wout_ref[...],
                    preferred_element_type=jnp.float32) + bout_ref[...]

    lane = jax.lax.broadcasted_iota(jnp.int32, heads.shape, 1)
    adv_sum = jnp.sum(jnp.where(lane < n_actions, heads, 0.0), axis=-1, keepdims=True)
    val = jnp.sum(jnp.where(lane == n_actions, heads, 0.0), axis=-1, keepdims=True)

    # out = value + advantage - mean(advantage); only lanes [0, A) are meaningful
    # (the wrapper slices them out), so a single fused lane-dense store is used.
    out_ref[...] = (heads + val - adv_sum * (1.0 / n_actions)).astype(out_ref.dtype)


def dueling_forward(state, params, *, tile_b=512, compute_dtype=jnp.float32):
    """state: [B, n_states] float32; params: dict of (W, b) pairs, W stored as [in, out]."""
    B, n_states = state.shape
    hidden = params["w2"].shape[0]
    n_actions = params["w3"].shape[1]

    Kp = _round_up(n_states, 128)
    Hp = _round_up(hidden, 128)
    Np = _round_up(n_actions + 1, 128)

    # --- pack / pad parameters (wrapper-side, zero padding keeps the math exact) ---
    def pad2(a, rows, cols):
        return jnp.pad(a, ((0, rows - a.shape[0]), (0, cols - a.shape[1])))

    w1 = pad2(params["w1"], Kp, Hp).astype(compute_dtype)
    b1 = pad2(params["b1"], 1, Hp).astype(jnp.float32)

    # [W2 | W4] : Hp -> 2*Hp
    w24 = jnp.concatenate([pad2(params["w2"], Hp, Hp),
                           pad2(params["w4"], Hp, Hp)], axis=1).astype(compute_dtype)
    b24 = jnp.concatenate([pad2(params["b2"], 1, Hp),
                           pad2(params["b4"], 1, Hp)], axis=1).astype(jnp.float32)

    # block-diag(W3, W5) : 2*Hp -> Np   (cols [0,A) = advantage, col A = value)
    wout = jnp.zeros((2 * Hp, Np), dtype=jnp.float32)
    wout = wout.at[:Hp, :n_actions].set(pad2(params["w3"], Hp, n_actions))
    wout = wout.at[Hp:, n_actions:n_actions + 1].set(pad2(params["w5"], Hp, 1))
    wout = wout.astype(compute_dtype)
    bout = jnp.zeros((1, Np), dtype=jnp.float32)
    bout = bout.at[:, :n_actions].set(params["b3"])
    bout = bout.at[:, n_actions:n_actions + 1].set(params["b5"])

    # --- batch tiling (grid over batch; weights stay resident) ---
    tile_b = min(tile_b, _round_up(B, 8))          # multiple of 8 sublanes
    Bp = _round_up(B, tile_b)
    x = jnp.pad(state, ((0, Bp - B), (0, Kp - n_states))).astype(compute_dtype)

    grid = (Bp // tile_b,)
    itemsize = jnp.dtype(compute_dtype).itemsize
    flops = 2 * Bp * (Kp * Hp + Hp * 2 * Hp + 2 * Hp * Np)
    bytes_accessed = (Bp * Kp + Kp * Hp + Hp * 2 * Hp + 2 * Hp * Np) * itemsize \
                     + Bp * Np * 4 + (Hp + 2 * Hp + Np) * 4

    kernel = functools.partial(_dueling_kernel, n_actions=n_actions)

    out_padded = pl.pallas_call(
        kernel,
        out_shape=jax.ShapeDtypeStruct((Bp, Np), jnp.float32),
        grid=grid,
        in_specs=[
            pl.BlockSpec((tile_b, Kp), lambda i: (i, 0)),      # state tile (pipelined)
            pl.BlockSpec((Kp, Hp), lambda i: (0, 0)),          # W1 (resident)
            pl.BlockSpec((1, Hp), lambda i: (0, 0)),           # b1
            pl.BlockSpec((Hp, 2 * Hp), lambda i: (0, 0)),      # [W2|W4]
            pl.BlockSpec((1, 2 * Hp), lambda i: (0, 0)),       # [b2|b4]
            pl.BlockSpec((2 * Hp, Np), lambda i: (0, 0)),      # block-diag(W3, W5)
            pl.BlockSpec((1, Np), lambda i: (0, 0)),           # [b3, b5, 0...]
        ],
        out_specs=pl.BlockSpec((tile_b, Np), lambda i: (i, 0)),  # lane-dense output
        compiler_params=pltpu.CompilerParams(
            dimension_semantics=("parallel",)),
        cost_estimate=pl.CostEstimate(flops=flops, transcendentals=0,
                                      bytes_accessed=bytes_accessed),
    )(x, w1, b1, w24, b24, wout, bout)

    return out_padded[:B, :n_actions]


def _orthogonal(key, rows, cols, gain=1.0):
    """Deterministic orthogonal init (mirrors nn.init.orthogonal_ semantics)."""
    a = jax.random.normal(key, (rows, cols), dtype=jnp.float32)
    flat = a if rows >= cols else a.T
    q, r = jnp.linalg.qr(flat)
    q = q * jnp.sign(jnp.diag(r))
    if rows < cols:
        q = q.T
    return gain * q[:rows, :cols]


def make_params(key, n_states, n_actions, hidden, std=1.0, bias_const=1e-6):
    ks = jax.random.split(key, 5)
    # PyTorch Linear weight is [out, in]; store transposed as [in, out].
    w1 = _orthogonal(ks[0], hidden, n_states, std).T
    w2 = _orthogonal(ks[1], hidden, hidden, std).T
    w3 = _orthogonal(ks[2], n_actions, hidden, std).T
    w4 = _orthogonal(ks[3], hidden, hidden, std).T
    w5 = _orthogonal(ks[4], 1, hidden, std).T
    b = lambda n: jnp.full((1, n), bias_const, dtype=jnp.float32)
    return {
        "w1": w1, "b1": b(hidden),
        "w2": w2, "b2": b(hidden),
        "w3": w3, "b3": b(n_actions),
        "w4": w4, "b4": b(hidden),
        "w5": w5, "b5": b(1),
    }


def reference_forward(state, p):
    """Pure-JAX reference for correctness check."""
    feat = jnp.maximum(state @ p["w1"] + p["b1"], 0.0)
    adv = jnp.maximum(feat @ p["w2"] + p["b2"], 0.0) @ p["w3"] + p["b3"]
    val = jnp.maximum(feat @ p["w4"] + p["b4"], 0.0) @ p["w5"] + p["b5"]
    return val + adv - jnp.mean(adv, axis=-1, keepdims=True)


if __name__ == "__main__":
    B, n_states, n_actions, hidden = 2, 8, 4, 32

    key = jax.random.PRNGKey(0)
    k_state, k_params = jax.random.split(key)
    state = jax.random.normal(k_state, (B, n_states), dtype=jnp.float32)
    params = make_params(k_params, n_states, n_actions, hidden)

    out = dueling_forward(state, params)          # f32 path (bit-exact vs reference)
    out = jax.block_until_ready(out)

    ref = reference_forward(state, params)
    assert out.shape == (B, n_actions)
    assert jnp.allclose(out, ref, atol=1e-5, rtol=1e-5), "mismatch vs reference"

    print("KERNEL_OK")
</pallas_src>

<mosaic_0001>
module attributes {stable_mosaic.version = 11 : i64} {
  func.func @_dueling_kernel(%arg0: i32, %arg1: memref<8x128xf32, #tpu.memory_space<vmem>>, %arg2: memref<128x128xf32, #tpu.memory_space<vmem>>, %arg3: memref<1x128xf32, #tpu.memory_space<vmem>>, %arg4: memref<128x256xf32, #tpu.memory_space<vmem>>, %arg5: memref<1x256xf32, #tpu.memory_space<vmem>>, %arg6: memref<256x128xf32, #tpu.memory_space<vmem>>, %arg7: memref<1x128xf32, #tpu.memory_space<vmem>>, %arg8: memref<8x128xf32, #tpu.memory_space<vmem>>) attributes {dimension_semantics = [#tpu.dimension_semantics<parallel>], iteration_bounds = array<i64: 1>, scalar_prefetch = 0 : i64, scratch_operands = 0 : i64, tpu.core_type = #tpu.core_type<tc>, window_params = [{transform_indices = @transform_0, window_bounds = array<i64: 8, 128>}, {pipeline_mode = #tpu.pipeline_mode<synchronous>, transform_indices = @transform_1, window_bounds = array<i64: 128, 128>}, {pipeline_mode = #tpu.pipeline_mode<synchronous>, transform_indices = @transform_2, window_bounds = array<i64: 1, 128>}, {pipeline_mode = #tpu.pipeline_mode<synchronous>, transform_indices = @transform_3, window_bounds = array<i64: 128, 256>}, {pipeline_mode = #tpu.pipeline_mode<synchronous>, transform_indices = @transform_4, window_bounds = array<i64: 1, 256>}, {pipeline_mode = #tpu.pipeline_mode<synchronous>, transform_indices = @transform_5, window_bounds = array<i64: 256, 128>}, {pipeline_mode = #tpu.pipeline_mode<synchronous>, transform_indices = @transform_6, window_bounds = array<i64: 1, 128>}, {transform_indices = @transform_7, window_bounds = array<i64: 8, 128>}]} {
    %c0 = arith.constant 0 : index
    %c0_0 = arith.constant 0 : index
    %0 = vector.load %arg1[%c0, %c0_0] : memref<8x128xf32, #tpu.memory_space<vmem>>, vector<8x128xf32>
    %c0_1 = arith.constant 0 : index
    %c0_2 = arith.constant 0 : index
    %1 = vector.load %arg2[%c0_1, %c0_2] : memref<128x128xf32, #tpu.memory_space<vmem>>, vector<128x128xf32>
    %cst = arith.constant dense<0.000000e+00> : vector<8x128xf32>
    %2 = tpu.matmul %0, %1, %cst {dimension_numbers = #tpu.dot_dimension_numbers<[1], [0], [0], [1], [0, 0, 1, 1], [], []>} : vector<8x128xf32>, vector<128x128xf32>, vector<8x128xf32> -> vector<8x128xf32>
    %c0_3 = arith.constant 0 : index
    %c0_4 = arith.constant 0 : index
    %3 = vector.load %arg3[%c0_3, %c0_4] : memref<1x128xf32, #tpu.memory_space<vmem>>, vector<1x128xf32>
    %4 = vector.broadcast %3 : vector<1x128xf32> to vector<8x128xf32>
    %5 = arith.addf %2, %4 : vector<8x128xf32>
    %cst_5 = arith.constant 0.000000e+00 : f32
    %6 = vector.broadcast %cst_5 : f32 to vector<8x128xf32>
    %7 = arith.maximumf %5, %6 : vector<8x128xf32>
    %c0_6 = arith.constant 0 : index
    %c0_7 = arith.constant 0 : index
    %8 = vector.load %arg4[%c0_6, %c0_7] : memref<128x256xf32, #tpu.memory_space<vmem>>, vector<128x256xf32>
    %cst_8 = arith.constant dense<0.000000e+00> : vector<8x256xf32>
    %9 = tpu.matmul %7, %8, %cst_8 {dimension_numbers = #tpu.dot_dimension_numbers<[1], [0], [0], [1], [0, 0, 1, 1], [], []>} : vector<8x128xf32>, vector<128x256xf32>, vector<8x256xf32> -> vector<8x256xf32>
    %c0_9 = arith.constant 0 : index
    %c0_10 = arith.constant 0 : index
    %10 = vector.load %arg5[%c0_9, %c0_10] : memref<1x256xf32, #tpu.memory_space<vmem>>, vector<1x256xf32>
    %11 = vector.broadcast %10 : vector<1x256xf32> to vector<8x256xf32>
    %12 = arith.addf %9, %11 : vector<8x256xf32>
    %cst_11 = arith.constant 0.000000e+00 : f32
    %13 = vector.broadcast %cst_11 : f32 to vector<8x256xf32>
    %14 = arith.maximumf %12, %13 : vector<8x256xf32>
    %c0_12 = arith.constant 0 : index
    %c0_13 = arith.constant 0 : index
    %15 = vector.load %arg6[%c0_12, %c0_13] : memref<256x128xf32, #tpu.memory_space<vmem>>, vector<256x128xf32>
    %cst_14 = arith.constant dense<0.000000e+00> : vector<8x128xf32>
    %16 = tpu.matmul %14, %15, %cst_14 {dimension_numbers = #tpu.dot_dimension_numbers<[1], [0], [0], [1], [0, 0, 1, 1], [], []>} : vector<8x256xf32>, vector<256x128xf32>, vector<8x128xf32> -> vector<8x128xf32>
    %c0_15 = arith.constant 0 : index
    %c0_16 = arith.constant 0 : index
    %17 = vector.load %arg7[%c0_15, %c0_16] : memref<1x128xf32, #tpu.memory_space<vmem>>, vector<1x128xf32>
    %18 = vector.broadcast %17 : vector<1x128xf32> to vector<8x128xf32>
    %19 = arith.addf %16, %18 : vector<8x128xf32>
    %20 = tpu.iota {dimensions = array<i32: 1>} : vector<8x128xi32>
    %c4_i32 = arith.constant 4 : i32
    %21 = vector.broadcast %c4_i32 : i32 to vector<8x128xi32>
    %22 = arith.cmpi slt, %20, %21 : vector<8x128xi32>
    %cst_17 = arith.constant 0.000000e+00 : f32
    %23 = vector.broadcast %cst_17 : f32 to vector<8x128xf32>
    %24 = arith.select %22, %19, %23 : vector<8x128xi1>, vector<8x128xf32>
    %cst_18 = arith.constant dense<0.000000e+00> : vector<8xf32>
    %25 = vector.multi_reduction <add>, %24, %cst_18 [1] : vector<8x128xf32> to vector<8xf32>
    %26 = vector.shape_cast %25 : vector<8xf32> to vector<8x1xf32>
    %c4_i32_19 = arith.constant 4 : i32
    %27 = vector.broadcast %c4_i32_19 : i32 to vector<8x128xi32>
    %28 = arith.cmpi eq, %20, %27 : vector<8x128xi32>
    %cst_20 = arith.constant 0.000000e+00 : f32
    %29 = vector.broadcast %cst_20 : f32 to vector<8x128xf32>
    %30 = arith.select %28, %19, %29 : vector<8x128xi1>, vector<8x128xf32>
    %cst_21 = arith.constant dense<0.000000e+00> : vector<8xf32>
    %31 = vector.multi_reduction <add>, %30, %cst_21 [1] : vector<8x128xf32> to vector<8xf32>
    %32 = vector.shape_cast %31 : vector<8xf32> to vector<8x1xf32>
    %33 = vector.broadcast %32 : vector<8x1xf32> to vector<8x128xf32>
    %34 = arith.addf %19, %33 : vector<8x128xf32>
    %cst_22 = arith.constant 2.500000e-01 : f32
    %35 = vector.broadcast %cst_22 : f32 to vector<8x1xf32>
    %36 = arith.mulf %26, %35 : vector<8x1xf32>
    %37 = vector.broadcast %36 : vector<8x1xf32> to vector<8x128xf32>
    %38 = arith.subf %34, %37 : vector<8x128xf32>
    %c0_23 = arith.constant 0 : index
    %c0_24 = arith.constant 0 : index
    %39 = vector.load %arg8[%c0_23, %c0_24] : memref<8x128xf32, #tpu.memory_space<vmem>>, vector<8x128xf32>
    tpu.vector_store %arg8[%c0_23, %c0_24], %38 {strides = array<i32>} : memref<8x128xf32, #tpu.memory_space<vmem>>, vector<8x128xf32>,
    return
  }
  func.func @transform_0(%arg0: i32) -> (i32, i32) {
    %c0_i32 = arith.constant 0 : i32
    %c0_i32_0 = arith.constant 0 : i32
    return %arg0, %c0_i32 : i32, i32
  }
  func.func @transform_1(%arg0: i32) -> (i32, i32) {
    %c0_i32 = arith.constant 0 : i32
    %c0_i32_0 = arith.constant 0 : i32
    %c0_i32_1 = arith.constant 0 : i32
    return %c0_i32, %c0_i32_0 : i32, i32
  }
  func.func @transform_2(%arg0: i32) -> (i32, i32) {
    %c0_i32 = arith.constant 0 : i32
    %c0_i32_0 = arith.constant 0 : i32
    %c0_i32_1 = arith.constant 0 : i32
    return %c0_i32, %c0_i32_0 : i32, i32
  }
  func.func @transform_3(%arg0: i32) -> (i32, i32) {
    %c0_i32 = arith.constant 0 : i32
    %c0_i32_0 = arith.constant 0 : i32
    %c0_i32_1 = arith.constant 0 : i32
    return %c0_i32, %c0_i32_0 : i32, i32
  }
  func.func @transform_4(%arg0: i32) -> (i32, i32) {
    %c0_i32 = arith.constant 0 : i32
    %c0_i32_0 = arith.constant 0 : i32
    %c0_i32_1 = arith.constant 0 : i32
    return %c0_i32, %c0_i32_0 : i32, i32
  }
  func.func @transform_5(%arg0: i32) -> (i32, i32) {
    %c0_i32 = arith.constant 0 : i32
    %c0_i32_0 = arith.constant 0 : i32
    %c0_i32_1 = arith.constant 0 : i32
    return %c0_i32, %c0_i32_0 : i32, i32
  }
  func.func @transform_6(%arg0: i32) -> (i32, i32) {
    %c0_i32 = arith.constant 0 : i32
    %c0_i32_0 = arith.constant 0 : i32
    %c0_i32_1 = arith.constant 0 : i32
    return %c0_i32, %c0_i32_0 : i32, i32
  }
  func.func @transform_7(%arg0: i32) -> (i32, i32) {
    %c0_i32 = arith.constant 0 : i32
    %c0_i32_0 = arith.constant 0 : i32
    return %arg0, %c0_i32 : i32, i32
  }
}

</mosaic_0001>

<llo_original>
// kernel: tpu_custom_call.1
$region0: #{tpu_custom_call.1}
  #allocation0 [shape = 'u32[]', space=smem, size = 0x4, offset = 0x4, fixed_abs, tag = 'smem constant byte address 0x4 - core index']
  #allocation1 [shape = 'u32[144,128]{1,0:T(1,128)}', space=vmem, size = 0x12000, scoped, tag = 'internal scratch']
  %s0 = inlined_call_operand.hbm [shape: f32[8,128], index: 0, kind: input, shape index: {}]
  %s1 = inlined_call_operand.hbm [shape: f32[128,128], index: 1, kind: input, shape index: {}]
  %s2 = inlined_call_operand.vmem [shape: f32[1,128], index: 2, kind: input, shape index: {}]
  %s3 = inlined_call_operand.hbm [shape: f32[128,256], index: 3, kind: input, shape index: {}]
  %s4 = inlined_call_operand.vmem [shape: f32[1,256], index: 4, kind: input, shape index: {}]
  %s5 = inlined_call_operand.hbm [shape: f32[256,128], index: 5, kind: input, shape index: {}]
  %s6 = inlined_call_operand.vmem [shape: f32[1,128], index: 6, kind: input, shape index: {}]
  %s7 = inlined_call_operand.hbm [shape: f32[8,128], index: 7, kind: output, shape index: {}]
  %s8 = sld [smem:[#allocation0]]
  $region54: #{tpu_custom_call.1} parent=0
    _
  %s10 = ssub.s32 1, %s8
  %s11 = scalar_select 0, %s10, %s8
  $region1: #{tpu_custom_call.1} parent=0
    #allocation2 [shape = 'u8[4096]{0}', space=vmem, size = 0x1000, scoped, tag = 'input window, operand 0, single buffered']
    #allocation3 [shape = 's32[1]{0}', space=sflag, size = 0x4, scoped, tag = 'scoped memory for tpu_custom_call.1']
    #allocation4 [shape = 's32[1]{0}', space=sflag, size = 0x4, scoped, tag = 'scoped memory for tpu_custom_call.1']
    #allocation5 [shape = 'u8[65536]{0}', space=vmem, size = 0x10000, scoped, tag = 'input window, operand 1, single buffered']
    #allocation6 [shape = 's32[1]{0}', space=sflag, size = 0x4, scoped, tag = 'scoped memory for tpu_custom_call.1']
    #allocation7 [shape = 'u8[131072]{0}', space=vmem, size = 0x20000, scoped, tag = 'input window, operand 3, single buffered']
    #allocation8 [shape = 'u8[131072]{0}', space=vmem, size = 0x20000, scoped, tag = 'input window, operand 5, single buffered']
    #allocation9 [shape = 's32[1]{0}', space=sflag, size = 0x4, scoped, tag = 'scoped memory for tpu_custom_call.1']
    #allocation10 [shape = 'u8[4096]{0}', space=vmem, size = 0x1000, scoped, tag = 'output window, operand 0, single buffered']
    %12 = vsyncpa [#allocation3], 0
    %13 = vsyncpa [#allocation6], 0
    %14 = vsyncpa [#allocation9], 0
    %15 = vsyncpa [#allocation4], 0
    // Predicated region
    $region2: #{tpu_custom_call.1} parent=1 // pred_check
      _
    $region3: #{tpu_custom_call.1} parent=1 // pred_check_branch
      %17 = sbr.rel (0) target = $region5
    $region4: #{tpu_custom_call.1} parent=1 // pred_region
      %s19 = ssub.s32 128, 128
      %20 = vsyncadd [#allocation3], %s19
      %s22 = sshll.u32 [#allocation2], 4
      %s23 = int_to_ptr.vmem [resolvable:$true] %s22
      %25 = dma.hbm_to_vmem [thread:$0]  %s0, 128, %s23, [#allocation3]
    $region5: #{tpu_custom_call.1} parent=1 // pred_fallthru
      _
    // Predicated region
    $region6: #{tpu_custom_call.1} parent=1 // pred_check
      _
    $region7: #{tpu_custom_call.1} parent=1 // pred_check_branch
      %27 = sbr.rel (0) target = $region9
    $region8: #{tpu_custom_call.1} parent=1 // pred_region
      %s29 = ssub.s32 2048, 2048
      %30 = vsyncadd [#allocation6], %s29
      %s31 = sshll.u32 [#allocation5], 4
      %s32 = int_to_ptr.vmem [resolvable:$true] %s31
      %37 = dma.hbm_to_vmem [thread:$0]  %s1, 2048, %s32, [#allocation6], 128, 128, 8
    $region9: #{tpu_custom_call.1} parent=1 // pred_fallthru
      _
    // Predicated region
    $region10: #{tpu_custom_call.1} parent=1 // pred_check
      _
    $region11: #{tpu_custom_call.1} parent=1 // pred_check_branch
      %39 = sbr.rel (0) target = $region13
    $region12: #{tpu_custom_call.1} parent=1 // pred_region
      _
    $region13: #{tpu_custom_call.1} parent=1 // pred_fallthru
      _
    // Predicated region
    $region14: #{tpu_custom_call.1} parent=1 // pred_check
      _
    $region15: #{tpu_custom_call.1} parent=1 // pred_check_branch
      %41 = sbr.rel (0) target = $region17
    $region16: #{tpu_custom_call.1} parent=1 // pred_region
      %s43 = ssub.s32 4096, 4096
      %44 = vsyncadd [#allocation6], %s43
      %s45 = sshll.u32 [#allocation7], 4
      %s46 = int_to_ptr.vmem [resolvable:$true] %s45
      %51 = dma.hbm_to_vmem [thread:$0]  %s3, 4096, %s46, [#allocation6], 256, 256, 16
    $region17: #{tpu_custom_call.1} parent=1 // pred_fallthru
      _
    // Predicated region
    $region18: #{tpu_custom_call.1} parent=1 // pred_check
      _
    $region19: #{tpu_custom_call.1} parent=1 // pred_check_branch
      %53 = sbr.rel (0) target = $region21
    $region20: #{tpu_custom_call.1} parent=1 // pred_region
      _
    $region21: #{tpu_custom_call.1} parent=1 // pred_fallthru
      _
    // Predicated region
    $region22: #{tpu_custom_call.1} parent=1 // pred_check
      _
    $region23: #{tpu_custom_call.1} parent=1 // pred_check_branch
      %55 = sbr.rel (0) target = $region25
    $region24: #{tpu_custom_call.1} parent=1 // pred_region
      %s57 = ssub.s32 4096, 4096
      %58 = vsyncadd [#allocation9], %s57
      %s59 = sshll.u32 [#allocation8], 4
      %s60 = int_to_ptr.vmem [resolvable:$true] %s59
      %65 = dma.hbm_to_vmem [thread:$0]  %s5, 4096, %s60, [#allocation9], 128, 128, 8
    $region25: #{tpu_custom_call.1} parent=1 // pred_fallthru
      _
    // Predicated region
    $region26: #{tpu_custom_call.1} parent=1 // pred_check
      _
    $region27: #{tpu_custom_call.1} parent=1 // pred_check_branch
      %67 = sbr.rel (0) target = $region29
    $region28: #{tpu_custom_call.1} parent=1 // pred_region
      _
    $region29: #{tpu_custom_call.1} parent=1 // pred_fallthru
      _
    // Predicated region
    $region30: #{tpu_custom_call.1} parent=1 // pred_check
      _
    $region31: #{tpu_custom_call.1} parent=1 // pred_check_branch
      %69 = sbr.rel (0) target = $region33
    $region32: #{tpu_custom_call.1} parent=1 // pred_region
      %70 = dma.done [#allocation3], 128
    $region33: #{tpu_custom_call.1} parent=1 // pred_fallthru
      _
    // Predicated region
    $region34: #{tpu_custom_call.1} parent=1 // pred_check
      _
    $region35: #{tpu_custom_call.1} parent=1 // pred_check_branch
      %72 = sbr.rel (0) target = $region37
    $region36: #{tpu_custom_call.1} parent=1 // pred_region
      %73 = dma.done [#allocation6], 2048
    $region37: #{tpu_custom_call.1} parent=1 // pred_fallthru
      _
    // Predicated region
    $region38: #{tpu_custom_call.1} parent=1 // pred_check
      _
    $region39: #{tpu_custom_call.1} parent=1 // pred_check_branch
      %75 = sbr.rel (0) target = $region41
    $region40: #{tpu_custom_call.1} parent=1 // pred_region
      %76 = dma.done [#allocation6], 4096
    $region41: #{tpu_custom_call.1} parent=1 // pred_fallthru
      _
    // Predicated region
    $region42: #{tpu_custom_call.1} parent=1 // pred_check
      _
    $region43: #{tpu_custom_call.1} parent=1 // pred_check_branch
      %78 = sbr.rel (0) target = $region45
    $region44: #{tpu_custom_call.1} parent=1 // pred_region
      %79 = dma.done [#allocation9], 4096
    $region45: #{tpu_custom_call.1} parent=1 // pred_fallthru
      _
    %v80 = vld [vmem:[#allocation2] sm:$0xff]
    %v81 = vld [vmem:[#allocation5] sm:$0xff]
    %v82 = vld [vmem:[#allocation5 + $0x8] sm:$0xff]
    %v83 = vld [vmem:[#allocation5 + $0x10] sm:$0xff]
    %v84 = vld [vmem:[#allocation5 + $0x18] sm:$0xff]
    %v85 = vld [vmem:[#allocation5 + $0x20] sm:$0xff]
    %v86 = vld [vmem:[#allocation5 + $0x28] sm:$0xff]
    %v87 = vld [vmem:[#allocation5 + $0x30] sm:$0xff]
    %v88 = vld [vmem:[#allocation5 + $0x38] sm:$0xff]
    %v89 = vld [vmem:[#allocation5 + $0x40] sm:$0xff]
    %v90 = vld [vmem:[#allocation5 + $0x48] sm:$0xff]
    %v91 = vld [vmem:[#allocation5 + $0x50] sm:$0xff]
    %v92 = vld [vmem:[#allocation5 + $0x58] sm:$0xff]
    %v93 = vld [vmem:[#allocation5 + $0x60] sm:$0xff]
    %v94 = vld [vmem:[#allocation5 + $0x68] sm:$0xff]
    %v95 = vld [vmem:[#allocation5 + $0x70] sm:$0xff]
    %v96 = vld [vmem:[#allocation5 + $0x78] sm:$0xff]
    %v97 = vld [vmem:[%s2] sm:$0x1]
    %v99 = vlaneseq
    %v100 = vshrl.u32 %v99, 7
    %v101 = vsub.s32 0, %v100
    %v102 = vrot.slane %v97, %v101
    %104 = vmatprep.subr.mxu0 0.0
    %105 = vmatpush1.msra.mxu0 %v81
    %106 = vmatprep.subr.mxu0 0.0
    %107 = vmatpush1.msra.mxu0 %v82
    %108 = vmatprep.subr.mxu0 0.0
    %109 = vmatpush1.msra.mxu0 %v83
    %110 = vmatprep.subr.mxu0 0.0
    %111 = vmatpush1.msra.mxu0 %v84
    %112 = vmatprep.subr.mxu0 0.0
    %113 = vmatpush1.msra.mxu0 %v85
    %114 = vmatprep.subr.mxu0 0.0
    %115 = vmatpush1.msra.mxu0 %v86
    %116 = vmatprep.subr.mxu0 0.0
    %117 = vmatpush1.msra.mxu0 %v87
    %118 = vmatprep.subr.mxu0 0.0
    %119 = vmatpush1.msra.mxu0 %v88
    %120 = vmatprep.subr.mxu0 0.0
    %121 = vmatpush1.msra.mxu0 %v89
    %122 = vmatprep.subr.mxu0 0.0
    %123 = vmatpush1.msra.mxu0 %v90
    %124 = vmatprep.subr.mxu0 0.0
    %125 = vmatpush1.msra.mxu0 %v91
    %126 = vmatprep.subr.mxu0 0.0
    %127 = vmatpush1.msra.mxu0 %v92
    %128 = vmatprep.subr.mxu0 0.0
    %129 = vmatpush1.msra.mxu0 %v93
    %130 = vmatprep.subr.mxu0 0.0
    %131 = vmatpush1.msra.mxu0 %v94
    %132 = vmatprep.subr.mxu0 0.0
    %133 = vmatpush1.msra.mxu0 %v95
    %134 = vmatprep.subr.mxu0 0.0
    %135 = vmatpush1.msra.mxu0 %v96
    %136 = vmatprep.subr.mxu0 0.0
    %137 = vmatpush1.msra.mxu0 0.0
    %138 = vmatprep.subr.mxu0 0.0
    %139 = vmatpush1.msra.mxu0 0.0
    %140 = vmatprep.subr.mxu0 0.0
    %141 = vmatpush1.msra.mxu0 0.0
    %142 = vmatprep.subr.mxu0 0.0
    %143 = vmatpush1.msra.mxu0 0.0
    %144 = vmatprep.subr.mxu0 0.0
    %145 = vmatpush1.msra.mxu0 0.0
    %146 = vmatprep.subr.mxu0 0.0
    %147 = vmatpush1.msra.mxu0 0.0
    %148 = vmatprep.subr.mxu0 0.0
    %149 = vmatpush1.msra.mxu0 0.0
    %150 = vmatprep.subr.mxu0 0.0
    %151 = vmatpush1.msra.mxu0 0.0
    %152 = vmatprep.subr.mxu0 0.0
    %153 = vmatpush1.msra.mxu0 0.0
    %154 = vmatprep.subr.mxu0 0.0
    %155 = vmatpush1.msra.mxu0 0.0
    %156 = vmatprep.subr.mxu0 0.0
    %157 = vmatpush1.msra.mxu0 0.0
    %158 = vmatprep.subr.mxu0 0.0
    %159 = vmatpush1.msra.mxu0 0.0
    %160 = vmatprep.subr.mxu0 0.0
    %161 = vmatpush1.msra.mxu0 0.0
    %162 = vmatprep.subr.mxu0 0.0
    %163 = vmatpush1.msra.mxu0 0.0
    %164 = vmatprep.subr.mxu0 0.0
    %165 = vmatpush1.msra.mxu0 0.0
    %166 = vmatprep.subr.mxu0 0.0
    %167 = vmatpush1.msra.mxu0 0.0
    %168 = vmatprep.mubr.f32.mxu0 0.0
    %169 = vmatmul.mubr.f32.gmra.mrb[0].mxu0 %v80
    %v170 = vpop.f32.mrb[0].mxu0
    %v171 = vadd.f32 %v102, %v170
    %v172 = vpop.f32.mrb[0].mxu0
    %173 = vdwg.mxu0
    %v174 = vmax.f32 %v171, 0.0
    %v175 = vld [vmem:[#allocation7] sm:$0xff]
    %v176 = vld [vmem:[#allocation7 + $0x8] sm:$0xff]
    %v177 = vld [vmem:[#allocation7 + $0x10] sm:$0xff]
    %v178 = vld [vmem:[#allocation7 + $0x18] sm:$0xff]
    %v179 = vld [vmem:[#allocation7 + $0x20] sm:$0xff]
    %v180 = vld [vmem:[#allocation7 + $0x28] sm:$0xff]
    %v181 = vld [vmem:[#allocation7 + $0x30] sm:$0xff]
    %v182 = vld [vmem:[#allocation7 + $0x38] sm:$0xff]
    %v183 = vld [vmem:[#allocation7 + $0x40] sm:$0xff]
    %v184 = vld [vmem:[#allocation7 + $0x48] sm:$0xff]
    %v185 = vld [vmem:[#allocation7 + $0x50] sm:$0xff]
    %v186 = vld [vmem:[#allocation7 + $0x58] sm:$0xff]
    %v187 = vld [vmem:[#allocation7 + $0x60] sm:$0xff]
    %v188 = vld [vmem:[#allocation7 + $0x68] sm:$0xff]
    %v189 = vld [vmem:[#allocation7 + $0x70] sm:$0xff]
    %v190 = vld [vmem:[#allocation7 + $0x78] sm:$0xff]
    %v191 = vld [vmem:[#allocation7 + $0x80] sm:$0xff]
    %v192 = vld [vmem:[#allocation7 + $0x88] sm:$0xff]
    %v193 = vld [vmem:[#allocation7 + $0x90] sm:$0xff]
    %v194 = vld [vmem:[#allocation7 + $0x98] sm:$0xff]
    %v195 = vld [vmem:[#allocation7 + $0xa0] sm:$0xff]
    %v196 = vld [vmem:[#allocation7 + $0xa8] sm:$0xff]
    %v197 = vld [vmem:[#allocation7 + $0xb0] sm:$0xff]
    %v198 = vld [vmem:[#allocation7 + $0xb8] sm:$0xff]
    %v199 = vld [vmem:[#allocation7 + $0xc0] sm:$0xff]
    %v200 = vld [vmem:[#allocation7 + $0xc8] sm:$0xff]
    %v201 = vld [vmem:[#allocation7 + $0xd0] sm:$0xff]
    %v202 = vld [vmem:[#allocation7 + $0xd8] sm:$0xff]
    %v203 = vld [vmem:[#allocation7 + $0xe0] sm:$0xff]
    %v204 = vld [vmem:[#allocation7 + $0xe8] sm:$0xff]
    %v205 = vld [vmem:[#allocation7 + $0xf0] sm:$0xff]
    %v206 = vld [vmem:[#allocation7 + $0xf8] sm:$0xff]
    %v207 = vld [vmem:[%s4] sm:$0x3]
    %v209 = vlaneseq
    %v210 = vshrl.u32 %v209, 7
    %v211 = vsub.s32 0, %v210
    %v212 = vrot.slane %v207, %v211
    %v213 = vlaneseq
    %v214 = vshrl.u32 %v213, 7
    %v215 = vsub.s32 1, %v214
    %v216 = vrot.slane %v207, %v215
    %219 = vmatprep.subr.mxu0 %v176
    %220 = vmatpush1.msra.mxu0 %v175
    %221 = vmatprep.subr.mxu0 %v178
    %222 = vmatpush1.msra.mxu0 %v177
    %223 = vmatprep.subr.mxu0 %v180
    %224 = vmatpush1.msra.mxu0 %v179
    %225 = vmatprep.subr.mxu0 %v182
    %226 = vmatpush1.msra.mxu0 %v181
    %227 = vmatprep.subr.mxu0 %v184
    %228 = vmatpush1.msra.mxu0 %v183
    %229 = vmatprep.subr.mxu0 %v186
    %230 = vmatpush1.msra.mxu0 %v185
    %231 = vmatprep.subr.mxu0 %v188
    %232 = vmatpush1.msra.mxu0 %v187
    %233 = vmatprep.subr.mxu0 %v190
    %234 = vmatpush1.msra.mxu0 %v189
    %235 = vmatprep.subr.mxu0 %v192
    %236 = vmatpush1.msra.mxu0 %v191
    %237 = vmatprep.subr.mxu0 %v194
    %238 = vmatpush1.msra.mxu0 %v193
    %239 = vmatprep.subr.mxu0 %v196
    %240 = vmatpush1.msra.mxu0 %v195
    %241 = vmatprep.subr.mxu0 %v198
    %242 = vmatpush1.msra.mxu0 %v197
    %243 = vmatprep.subr.mxu0 %v200
    %244 = vmatpush1.msra.mxu0 %v199
    %245 = vmatprep.subr.mxu0 %v202
    %246 = vmatpush1.msra.mxu0 %v201
    %247 = vmatprep.subr.mxu0 %v204
    %248 = vmatpush1.msra.mxu0 %v203
    %249 = vmatprep.subr.mxu0 %v206
    %250 = vmatpush1.msra.mxu0 %v205
    %251 = vmatprep.subr.mxu0 0.0
    %252 = vmatpush1.msra.mxu0 0.0
    %253 = vmatprep.subr.mxu0 0.0
    %254 = vmatpush1.msra.mxu0 0.0
    %255 = vmatprep.subr.mxu0 0.0
    %256 = vmatpush1.msra.mxu0 0.0
    %257 = vmatprep.subr.mxu0 0.0
    %258 = vmatpush1.msra.mxu0 0.0
    %259 = vmatprep.subr.mxu0 0.0
    %260 = vmatpush1.msra.mxu0 0.0
    %261 = vmatprep.subr.mxu0 0.0
    %262 = vmatpush1.msra.mxu0 0.0
    %263 = vmatprep.subr.mxu0 0.0
    %264 = vmatpush1.msra.mxu0 0.0
    %265 = vmatprep.subr.mxu0 0.0
    %266 = vmatpush1.msra.mxu0 0.0
    %267 = vmatprep.subr.mxu0 0.0
    %268 = vmatpush1.msra.mxu0 0.0
    %269 = vmatprep.subr.mxu0 0.0
    %270 = vmatpush1.msra.mxu0 0.0
    %271 = vmatprep.subr.mxu0 0.0
    %272 = vmatpush1.msra.mxu0 0.0
    %273 = vmatprep.subr.mxu0 0.0
    %274 = vmatpush1.msra.mxu0 0.0
    %275 = vmatprep.subr.mxu0 0.0
    %276 = vmatpush1.msra.mxu0 0.0
    %277 = vmatprep.subr.mxu0 0.0
    %278 = vmatpush1.msra.mxu0 0.0
    %279 = vmatprep.subr.mxu0 0.0
    %280 = vmatpush1.msra.mxu0 0.0
    %281 = vmatprep.subr.mxu0 0.0
    %282 = vmatpush1.msra.mxu0 0.0
    %283 = vmatprep.mubr.f32.mxu0 0.0
    %284 = vmatmul.mubr.f32.gmra.mrb[0].mxu0 %v174
    %v285 = vpop.f32.mrb[0].mxu0
    %v286 = vadd.f32 %v212, %v285
    %v287 = vpop.f32.mrb[0].mxu0
    %v288 = vadd.f32 %v216, %v287
    %289 = vdwg.mxu0
    %v290 = vmax.f32 %v286, 0.0
    %v291 = vmax.f32 %v288, 0.0
    %v292 = vld [vmem:[#allocation8] sm:$0xff]
    %v293 = vld [vmem:[#allocation8 + $0x8] sm:$0xff]
    %v294 = vld [vmem:[#allocation8 + $0x10] sm:$0xff]
    %v295 = vld [vmem:[#allocation8 + $0x18] sm:$0xff]
    %v296 = vld [vmem:[#allocation8 + $0x20] sm:$0xff]
    %v297 = vld [vmem:[#allocation8 + $0x28] sm:$0xff]
    %v298 = vld [vmem:[#allocation8 + $0x30] sm:$0xff]
    %v299 = vld [vmem:[#allocation8 + $0x38] sm:$0xff]
    %v300 = vld [vmem:[#allocation8 + $0x40] sm:$0xff]
    %v301 = vld [vmem:[#allocation8 + $0x48] sm:$0xff]
    %v302 = vld [vmem:[#allocation8 + $0x50] sm:$0xff]
    %v303 = vld [vmem:[#allocation8 + $0x58] sm:$0xff]
    %v304 = vld [vmem:[#allocation8 + $0x60] sm:$0xff]
    %v305 = vld [vmem:[#allocation8 + $0x68] sm:$0xff]
    %v306 = vld [vmem:[#allocation8 + $0x70] sm:$0xff]
    %v307 = vld [vmem:[#allocation8 + $0x78] sm:$0xff]
    %v308 = vld [vmem:[#allocation8 + $0x80] sm:$0xff]
    %v309 = vld [vmem:[#allocation8 + $0x88] sm:$0xff]
    %v310 = vld [vmem:[#allocation8 + $0x90] sm:$0xff]
    %v311 = vld [vmem:[#allocation8 + $0x98] sm:$0xff]
    %v312 = vld [vmem:[#allocation8 + $0xa0] sm:$0xff]
    %v313 = vld [vmem:[#allocation8 + $0xa8] sm:$0xff]
    %v314 = vld [vmem:[#allocation8 + $0xb0] sm:$0xff]
    %v315 = vld [vmem:[#allocation8 + $0xb8] sm:$0xff]
    %v316 = vld [vmem:[#allocation8 + $0xc0] sm:$0xff]
    %v317 = vld [vmem:[#allocation8 + $0xc8] sm:$0xff]
    %v318 = vld [vmem:[#allocation8 + $0xd0] sm:$0xff]
    %v319 = vld [vmem:[#allocation8 + $0xd8] sm:$0xff]
    %v320 = vld [vmem:[#allocation8 + $0xe0] sm:$0xff]
    %v321 = vld [vmem:[#allocation8 + $0xe8] sm:$0xff]
    %v322 = vld [vmem:[#allocation8 + $0xf0] sm:$0xff]
    %v323 = vld [vmem:[#allocation8 + $0xf8] sm:$0xff]
    %v324 = vld [vmem:[%s6] sm:$0x1]
    %v326 = vlaneseq
    %v327 = vshrl.u32 %v326, 7
    %v328 = vsub.s32 0, %v327
    %v329 = vrot.slane %v324, %v328
    %331 = vmatprep.subr.mxu0 0.0
    %332 = vmatpush1.msra.mxu0 %v292
    %333 = vmatprep.subr.mxu0 0.0
    %334 = vmatpush1.msra.mxu0 %v293
    %335 = vmatprep.subr.mxu0 0.0
    %336 = vmatpush1.msra.mxu0 %v294
    %337 = vmatprep.subr.mxu0 0.0
    %338 = vmatpush1.msra.mxu0 %v295
    %339 = vmatprep.subr.mxu0 0.0
    %340 = vmatpush1.msra.mxu0 %v296
    %341 = vmatprep.subr.mxu0 0.0
    %342 = vmatpush1.msra.mxu0 %v297
    %343 = vmatprep.subr.mxu0 0.0
    %344 = vmatpush1.msra.mxu0 %v298
    %345 = vmatprep.subr.mxu0 0.0
    %346 = vmatpush1.msra.mxu0 %v299
    %347 = vmatprep.subr.mxu0 0.0
    %348 = vmatpush1.msra.mxu0 %v300
    %349 = vmatprep.subr.mxu0 0.0
    %350 = vmatpush1.msra.mxu0 %v301
    %351 = vmatprep.subr.mxu0 0.0
    %352 = vmatpush1.msra.mxu0 %v302
    %353 = vmatprep.subr.mxu0 0.0
    %354 = vmatpush1.msra.mxu0 %v303
    %355 = vmatprep.subr.mxu0 0.0
    %356 = vmatpush1.msra.mxu0 %v304
    %357 = vmatprep.subr.mxu0 0.0
    %358 = vmatpush1.msra.mxu0 %v305
    %359 = vmatprep.subr.mxu0 0.0
    %360 = vmatpush1.msra.mxu0 %v306
    %361 = vmatprep.subr.mxu0 0.0
    %362 = vmatpush1.msra.mxu0 %v307
    %363 = vmatprep.subr.mxu0 0.0
    %364 = vmatpush1.msra.mxu0 %v308
    %365 = vmatprep.subr.mxu0 0.0
    %366 = vmatpush1.msra.mxu0 %v309
    %367 = vmatprep.subr.mxu0 0.0
    %368 = vmatpush1.msra.mxu0 %v310
    %369 = vmatprep.subr.mxu0 0.0
    %370 = vmatpush1.msra.mxu0 %v311
    %371 = vmatprep.subr.mxu0 0.0
    %372 = vmatpush1.msra.mxu0 %v312
    %373 = vmatprep.subr.mxu0 0.0
    %374 = vmatpush1.msra.mxu0 %v313
    %375 = vmatprep.subr.mxu0 0.0
    %376 = vmatpush1.msra.mxu0 %v314
    %377 = vmatprep.subr.mxu0 0.0
    %378 = vmatpush1.msra.mxu0 %v315
    %379 = vmatprep.subr.mxu0 0.0
    %380 = vmatpush1.msra.mxu0 %v316
    %381 = vmatprep.subr.mxu0 0.0
    %382 = vmatpush1.msra.mxu0 %v317
    %383 = vmatprep.subr.mxu0 0.0
    %384 = vmatpush1.msra.mxu0 %v318
    %385 = vmatprep.subr.mxu0 0.0
    %386 = vmatpush1.msra.mxu0 %v319
    %387 = vmatprep.subr.mxu0 0.0
    %388 = vmatpush1.msra.mxu0 %v320
    %389 = vmatprep.subr.mxu0 0.0
    %390 = vmatpush1.msra.mxu0 %v321
    %391 = vmatprep.subr.mxu0 0.0
    %392 = vmatpush1.msra.mxu0 %v322
    %393 = vmatprep.subr.mxu0 0.0
    %394 = vmatpush1.msra.mxu0 %v323
    %395 = vmatprep.mubr.f32.mxu0 %v291
    %396 = vmatmul.mubr.f32.gmra.mrb[0].mxu0 %v290
    %v397 = vpop.f32.mrb[0].mxu0
    %v398 = vadd.f32 %v329, %v397
    %v399 = vpop.f32.mrb[0].mxu0
    %400 = vdwg.mxu0
    %v401 = vlaneseq
    %v402 = vand.u32 %v401, 127
    %vm403 = vcmp.lt.s32.totalorder %v402, 4
    %v404 = vsel %vm403, %v398, 0.0
    %405 = vadd.xlane.f32.xlu0 %v404
    %v406 = vpop.xlane.xlu0 %405
    %vm407 = vcmp.eq.s32.totalorder %v402, 4
    %v408 = vsel %vm407, %v398, 0.0
    %409 = vadd.xlane.f32.xlu0 %v408
    %v410 = vpop.xlane.xlu0 %409
    %v411 = vadd.f32 %v398, %v410
    %v412 = vmul.f32 %v406, 0.25
    %v413 = vsub.f32 %v411, %v412
    %414 = vst [vmem:[#allocation10] sm:$0xff] %v413
    // Predicated region
    $region46: #{tpu_custom_call.1} parent=1 // pred_check
      _
    $region47: #{tpu_custom_call.1} parent=1 // pred_check_branch
      %416 = sbr.rel (0) target = $region49
    $region48: #{tpu_custom_call.1} parent=1 // pred_region
      %s418 = ssub.s32 128, 128
      %419 = vsyncadd [#allocation4], %s418
      %s421 = sshll.u32 [#allocation10], 4
      %s422 = int_to_ptr.vmem [resolvable:$true] %s421
      %424 = dma.vmem_to_hbm [thread:$0]  %s422, 128, %s7, [#allocation4]
    $region49: #{tpu_custom_call.1} parent=1 // pred_fallthru
      _
    // Predicated region
    $region50: #{tpu_custom_call.1} parent=1 // pred_check
      _
    $region51: #{tpu_custom_call.1} parent=1 // pred_check_branch
      %426 = sbr.rel (0) target = $region53
    $region52: #{tpu_custom_call.1} parent=1 // pred_region
      %427 = dma.done [#allocation4], 128
    $region53: #{tpu_custom_call.1} parent=1 // pred_fallthru
      _
    %428 = vsyncpa [#allocation3], 1
    %429 = vsyncpa [#allocation6], 1
    %430 = vsyncpa [#allocation9], 1
    %431 = vsyncpa [#allocation4], 1

</llo_original>
